<compile_context>
chip_gen: v7x
topology: tpu7x:2x2x1
jax: 0.10.0
libtpu: 0.0.40
codegen_flags: <defaults>
</compile_context>

<pallas_src>
import jax
import jax.numpy as jnp
from jax.experimental import pallas as pl
from jax.experimental.pallas import tpu as pltpu


def _sigmoid_f32(z):
    # sigmoid(z) = 0.5 * tanh(0.5 * z) + 0.5  -> single EUP push.
    return 0.5 * jnp.tanh(0.5 * z) + 0.5


def mlp_kernel(x_ref,
               w1, b1, w2, b2, w3, b3, w4, b4, w5, b5,
               o_ref):
    """Fused 5-layer MLP forward, batch-on-lanes layout.

    x_ref : (in_features, TB) bf16  (TB = batch tile, multiple of 128, on lanes)
    w1..4 : (out_l, in_l)     bf16  (BatchNorm folded in)
    b1..4 : (out_l, 1)        f32
    w5    : (32, 1)           f32   (final layer, VPU path)
    b5    : (1, 1)            f32
    o_ref : (1, TB)           f32   (lane-dense store)
    """
    h = x_ref[...]                                      # (in_features, TB) bf16

    def layer(h_bf16, w_ref, b_ref):
        z = jnp.dot(w_ref[...], h_bf16,
                    preferred_element_type=jnp.float32)  # MXU, f32 accumulate
        return z + b_ref[...]                            # bias bcast over lanes

    # Hidden layers: sigmoid in f32 (safe on v5e too), carried as bf16.
    h = _sigmoid_f32(layer(h, w1, b1)).astype(jnp.bfloat16)   # in  -> 16
    h = _sigmoid_f32(layer(h, w2, b2)).astype(jnp.bfloat16)   # 16  -> 32
    h = _sigmoid_f32(layer(h, w3, b3)).astype(jnp.bfloat16)   # 32  -> 64
    h = _sigmoid_f32(layer(h, w4, b4)).astype(jnp.bfloat16)   # 64  -> 32

    # Final 32 -> 1 layer: VPU broadcast-mul + sublane reduction (XLU),
    # avoids an M=1 MXU matmul.
    z5 = jnp.sum(w5[...] * h, axis=0, keepdims=True) + b5[...]   # (1, TB) f32
    o_ref[...] = _sigmoid_f32(z5)


def init_params(key, input_size):
    """PyTorch-like raw parameters + BN-folded kernel parameters.

    Returns (raw_params, kernel_params):
      raw_params    : per-layer tuples with PyTorch eval semantics (reference).
      kernel_params : [w1,b1,...,w5,b5]; w1..4 transposed BN-folded bf16 (out,in),
                      b1..4 f32 (out,1); w5 f32 (32,1), b5 f32 (1,1).
    """
    dims = [input_size, 16, 32, 64, 32, 1]
    eps = 1e-5
    keys = jax.random.split(key, 32)
    k = 0
    raw_params = []
    kernel_params = []
    for li in range(5):
        fan_in, fan_out = dims[li], dims[li + 1]
        bound = float(fan_in) ** -0.5
        w = jax.random.uniform(keys[k], (fan_in, fan_out), jnp.float32,
                               -bound, bound); k += 1
        b = jax.random.uniform(keys[k], (fan_out,), jnp.float32,
                               -bound, bound); k += 1
        if li < 4:
            gamma = 1.0 + 0.1 * jax.random.normal(keys[k], (fan_out,)); k += 1
            beta = 0.1 * jax.random.normal(keys[k], (fan_out,)); k += 1
            rmean = 0.1 * jax.random.normal(keys[k], (fan_out,)); k += 1
            rvar = 0.5 + jnp.abs(jax.random.normal(keys[k], (fan_out,))); k += 1
            raw_params.append((w, b, gamma, beta, rmean, rvar))
            # Fold BN (eval, running stats) into the linear layer.
            scale = gamma / jnp.sqrt(rvar + eps)
            w_f = w * scale[None, :]
            b_f = b * scale + beta - rmean * scale
            kernel_params.append(w_f.T.astype(jnp.bfloat16))     # (out, in) bf16
            kernel_params.append(b_f.reshape(fan_out, 1).astype(jnp.float32))
        else:
            raw_params.append((w, b))
            # Final layer goes down the VPU path: keep (in, out)=(32,1) f32.
            kernel_params.append(w.astype(jnp.float32))           # (32, 1) f32
            kernel_params.append(b.reshape(1, 1).astype(jnp.float32))
    return raw_params, kernel_params


def neural_network_forward(x, kernel_params, *, tb_max=1024):
    """x: (batch, input_size) f32  ->  (batch, 1) f32."""
    batch, in_features = x.shape

    # Batch tile (lane dim): multiple of 128. Force >=2 grid steps when the
    # batch allows it so v7x's two TensorCores both get work.
    padded128 = pl.cdiv(batch, 128) * 128
    if padded128 >= 2 * 128:
        half = pl.cdiv(padded128 // 2, 128) * 128
        tb = min(tb_max, half)
    else:
        tb = padded128
    padded = pl.cdiv(padded128, tb) * tb
    grid = (padded // tb,)

    # Fused pad + bf16 cast + transpose (no padded f32 staging copy).
    xt = jnp.pad(x.astype(jnp.bfloat16), ((0, padded - batch), (0, 0))).T

    def const_spec(shape):
        return pl.BlockSpec(shape, lambda i: (0, 0))   # VMEM-resident weights

    in_specs = [pl.BlockSpec((in_features, tb), lambda i: (0, i))]
    in_specs += [const_spec(p.shape) for p in kernel_params]

    out_t = pl.pallas_call(
        mlp_kernel,
        out_shape=jax.ShapeDtypeStruct((1, padded), jnp.float32),
        grid=grid,
        in_specs=in_specs,
        out_specs=pl.BlockSpec((1, tb), lambda i: (0, i)),
        compiler_params=pltpu.CompilerParams(
            dimension_semantics=("parallel",)),
    )(xt, *kernel_params)

    # Padded columns hold sigmoid(bias) garbage; slice before any reduction.
    return out_t[:, :batch].T                          # (batch, 1)


def reference_forward(x, raw_params):
    """Pure-JAX f32 reference with PyTorch (eval) semantics."""
    eps = 1e-5
    h = x
    for li in range(4):
        w, b, gamma, beta, rmean, rvar = raw_params[li]
        z = h @ w + b
        z = (z - rmean) / jnp.sqrt(rvar + eps) * gamma + beta
        h = jax.nn.sigmoid(z)
    w, b = raw_params[4]
    return jax.nn.sigmoid(h @ w + b)


if __name__ == "__main__":
    key = jax.random.PRNGKey(0)
    k_x, k_p = jax.random.split(key)

    batch, input_size = 8, 8                  # small synthetic shapes
    x = jax.random.normal(k_x, (batch, input_size), jnp.float32)
    raw_params, kernel_params = init_params(k_p, input_size)

    fwd = jax.jit(neural_network_forward)     # fuse the relayout with the call
    out = jax.block_until_ready(fwd(x, kernel_params))

    ref = reference_forward(x, raw_params)
    assert out.shape == (batch, 1), out.shape
    # bf16 input/activations/weights compound over 5 layers, but sigmoid's
    # max slope of 0.25 keeps the absolute error small; outputs live in (0,1).
    assert jnp.allclose(out, ref, atol=2.5e-2, rtol=0.0), (out, ref)

    print("KERNEL_OK")
</pallas_src>

<mosaic_0001>
module attributes {stable_mosaic.version = 11 : i64} {
  func.func @mlp_kernel(%arg0: i32, %arg1: memref<8x128xbf16, #tpu.memory_space<vmem>>, %arg2: memref<16x8xbf16, #tpu.memory_space<vmem>>, %arg3: memref<16x1xf32, #tpu.memory_space<vmem>>, %arg4: memref<32x16xbf16, #tpu.memory_space<vmem>>, %arg5: memref<32x1xf32, #tpu.memory_space<vmem>>, %arg6: memref<64x32xbf16, #tpu.memory_space<vmem>>, %arg7: memref<64x1xf32, #tpu.memory_space<vmem>>, %arg8: memref<32x64xbf16, #tpu.memory_space<vmem>>, %arg9: memref<32x1xf32, #tpu.memory_space<vmem>>, %arg10: memref<32x1xf32, #tpu.memory_space<vmem>>, %arg11: memref<1x1xf32, #tpu.memory_space<vmem>>, %arg12: memref<1x128xf32, #tpu.memory_space<vmem>>) attributes {dimension_semantics = [#tpu.dimension_semantics<parallel>], iteration_bounds = array<i64: 1>, scalar_prefetch = 0 : i64, scratch_operands = 0 : i64, tpu.core_type = #tpu.core_type<tc>, window_params = [{transform_indices = @transform_0, window_bounds = array<i64: 8, 128>}, {pipeline_mode = #tpu.pipeline_mode<synchronous>, transform_indices = @transform_1, window_bounds = array<i64: 16, 8>}, {pipeline_mode = #tpu.pipeline_mode<synchronous>, transform_indices = @transform_2, window_bounds = array<i64: 16, 1>}, {pipeline_mode = #tpu.pipeline_mode<synchronous>, transform_indices = @transform_3, window_bounds = array<i64: 32, 16>}, {pipeline_mode = #tpu.pipeline_mode<synchronous>, transform_indices = @transform_4, window_bounds = array<i64: 32, 1>}, {pipeline_mode = #tpu.pipeline_mode<synchronous>, transform_indices = @transform_5, window_bounds = array<i64: 64, 32>}, {pipeline_mode = #tpu.pipeline_mode<synchronous>, transform_indices = @transform_6, window_bounds = array<i64: 64, 1>}, {pipeline_mode = #tpu.pipeline_mode<synchronous>, transform_indices = @transform_7, window_bounds = array<i64: 32, 64>}, {pipeline_mode = #tpu.pipeline_mode<synchronous>, transform_indices = @transform_8, window_bounds = array<i64: 32, 1>}, {pipeline_mode = #tpu.pipeline_mode<synchronous>, transform_indices = @transform_9, window_bounds = array<i64: 32, 1>}, {pipeline_mode = #tpu.pipeline_mode<synchronous>, transform_indices = @transform_10, window_bounds = array<i64: 1, 1>}, {transform_indices = @transform_11, window_bounds = array<i64: 1, 128>}]} {
    %c0 = arith.constant 0 : index
    %c0_0 = arith.constant 0 : index
    %0 = vector.load %arg1[%c0, %c0_0] : memref<8x128xbf16, #tpu.memory_space<vmem>>, vector<8x128xbf16>
    %c0_1 = arith.constant 0 : index
    %c0_2 = arith.constant 0 : index
    %1 = vector.load %arg2[%c0_1, %c0_2] : memref<16x8xbf16, #tpu.memory_space<vmem>>, vector<16x8xbf16>
    %cst = arith.constant dense<0.000000e+00> : vector<16x128xf32>
    %2 = tpu.matmul %1, %0, %cst {dimension_numbers = #tpu.dot_dimension_numbers<[1], [0], [0], [1], [0, 0, 1, 1], [], []>} : vector<16x8xbf16>, vector<8x128xbf16>, vector<16x128xf32> -> vector<16x128xf32>
    %c0_3 = arith.constant 0 : index
    %c0_4 = arith.constant 0 : index
    %3 = vector.load %arg3[%c0_3, %c0_4] : memref<16x1xf32, #tpu.memory_space<vmem>>, vector<16x1xf32>
    %4 = vector.broadcast %3 : vector<16x1xf32> to vector<16x128xf32>
    %5 = arith.addf %2, %4 : vector<16x128xf32>
    %cst_5 = arith.constant 5.000000e-01 : f32
    %6 = vector.broadcast %cst_5 : f32 to vector<16x128xf32>
    %7 = arith.mulf %6, %5 : vector<16x128xf32>
    %8 = math.tanh %7 : vector<16x128xf32>
    %cst_6 = arith.constant 5.000000e-01 : f32
    %9 = vector.broadcast %cst_6 : f32 to vector<16x128xf32>
    %10 = arith.mulf %9, %8 : vector<16x128xf32>
    %cst_7 = arith.constant 5.000000e-01 : f32
    %11 = vector.broadcast %cst_7 : f32 to vector<16x128xf32>
    %12 = arith.addf %10, %11 : vector<16x128xf32>
    %13 = arith.truncf %12 : vector<16x128xf32> to vector<16x128xbf16>
    %c0_8 = arith.constant 0 : index
    %c0_9 = arith.constant 0 : index
    %14 = vector.load %arg4[%c0_8, %c0_9] : memref<32x16xbf16, #tpu.memory_space<vmem>>, vector<32x16xbf16>
    %cst_10 = arith.constant dense<0.000000e+00> : vector<32x128xf32>
    %15 = tpu.matmul %14, %13, %cst_10 {dimension_numbers = #tpu.dot_dimension_numbers<[1], [0], [0], [1], [0, 0, 1, 1], [], []>} : vector<32x16xbf16>, vector<16x128xbf16>, vector<32x128xf32> -> vector<32x128xf32>
    %c0_11 = arith.constant 0 : index
    %c0_12 = arith.constant 0 : index
    %16 = vector.load %arg5[%c0_11, %c0_12] : memref<32x1xf32, #tpu.memory_space<vmem>>, vector<32x1xf32>
    %17 = vector.broadcast %16 : vector<32x1xf32> to vector<32x128xf32>
    %18 = arith.addf %15, %17 : vector<32x128xf32>
    %cst_13 = arith.constant 5.000000e-01 : f32
    %19 = vector.broadcast %cst_13 : f32 to vector<32x128xf32>
    %20 = arith.mulf %19, %18 : vector<32x128xf32>
    %21 = math.tanh %20 : vector<32x128xf32>
    %cst_14 = arith.constant 5.000000e-01 : f32
    %22 = vector.broadcast %cst_14 : f32 to vector<32x128xf32>
    %23 = arith.mulf %22, %21 : vector<32x128xf32>
    %cst_15 = arith.constant 5.000000e-01 : f32
    %24 = vector.broadcast %cst_15 : f32 to vector<32x128xf32>
    %25 = arith.addf %23, %24 : vector<32x128xf32>
    %26 = arith.truncf %25 : vector<32x128xf32> to vector<32x128xbf16>
    %c0_16 = arith.constant 0 : index
    %c0_17 = arith.constant 0 : index
    %27 = vector.load %arg6[%c0_16, %c0_17] : memref<64x32xbf16, #tpu.memory_space<vmem>>, vector<64x32xbf16>
    %cst_18 = arith.constant dense<0.000000e+00> : vector<64x128xf32>
    %28 = tpu.matmul %27, %26, %cst_18 {dimension_numbers = #tpu.dot_dimension_numbers<[1], [0], [0], [1], [0, 0, 1, 1], [], []>} : vector<64x32xbf16>, vector<32x128xbf16>, vector<64x128xf32> -> vector<64x128xf32>
    %c0_19 = arith.constant 0 : index
    %c0_20 = arith.constant 0 : index
    %29 = vector.load %arg7[%c0_19, %c0_20] : memref<64x1xf32, #tpu.memory_space<vmem>>, vector<64x1xf32>
    %30 = vector.broadcast %29 : vector<64x1xf32> to vector<64x128xf32>
    %31 = arith.addf %28, %30 : vector<64x128xf32>
    %cst_21 = arith.constant 5.000000e-01 : f32
    %32 = vector.broadcast %cst_21 : f32 to vector<64x128xf32>
    %33 = arith.mulf %32, %31 : vector<64x128xf32>
    %34 = math.tanh %33 : vector<64x128xf32>
    %cst_22 = arith.constant 5.000000e-01 : f32
    %35 = vector.broadcast %cst_22 : f32 to vector<64x128xf32>
    %36 = arith.mulf %35, %34 : vector<64x128xf32>
    %cst_23 = arith.constant 5.000000e-01 : f32
    %37 = vector.broadcast %cst_23 : f32 to vector<64x128xf32>
    %38 = arith.addf %36, %37 : vector<64x128xf32>
    %39 = arith.truncf %38 : vector<64x128xf32> to vector<64x128xbf16>
    %c0_24 = arith.constant 0 : index
    %c0_25 = arith.constant 0 : index
    %40 = vector.load %arg8[%c0_24, %c0_25] : memref<32x64xbf16, #tpu.memory_space<vmem>>, vector<32x64xbf16>
    %cst_26 = arith.constant dense<0.000000e+00> : vector<32x128xf32>
    %41 = tpu.matmul %40, %39, %cst_26 {dimension_numbers = #tpu.dot_dimension_numbers<[1], [0], [0], [1], [0, 0, 1, 1], [], []>} : vector<32x64xbf16>, vector<64x128xbf16>, vector<32x128xf32> -> vector<32x128xf32>
    %c0_27 = arith.constant 0 : index
    %c0_28 = arith.constant 0 : index
    %42 = vector.load %arg9[%c0_27, %c0_28] : memref<32x1xf32, #tpu.memory_space<vmem>>, vector<32x1xf32>
    %43 = vector.broadcast %42 : vector<32x1xf32> to vector<32x128xf32>
    %44 = arith.addf %41, %43 : vector<32x128xf32>
    %cst_29 = arith.constant 5.000000e-01 : f32
    %45 = vector.broadcast %cst_29 : f32 to vector<32x128xf32>
    %46 = arith.mulf %45, %44 : vector<32x128xf32>
    %47 = math.tanh %46 : vector<32x128xf32>
    %cst_30 = arith.constant 5.000000e-01 : f32
    %48 = vector.broadcast %cst_30 : f32 to vector<32x128xf32>
    %49 = arith.mulf %48, %47 : vector<32x128xf32>
    %cst_31 = arith.constant 5.000000e-01 : f32
    %50 = vector.broadcast %cst_31 : f32 to vector<32x128xf32>
    %51 = arith.addf %49, %50 : vector<32x128xf32>
    %52 = arith.truncf %51 : vector<32x128xf32> to vector<32x128xbf16>
    %c0_32 = arith.constant 0 : index
    %c0_33 = arith.constant 0 : index
    %53 = vector.load %arg10[%c0_32, %c0_33] : memref<32x1xf32, #tpu.memory_space<vmem>>, vector<32x1xf32>
    %54 = arith.extf %52 : vector<32x128xbf16> to vector<32x128xf32>
    %55 = vector.broadcast %53 : vector<32x1xf32> to vector<32x128xf32>
    %56 = arith.mulf %55, %54 : vector<32x128xf32>
    %cst_34 = arith.constant dense<0.000000e+00> : vector<128xf32>
    %57 = vector.multi_reduction <add>, %56, %cst_34 [0] : vector<32x128xf32> to vector<128xf32>
    %58 = vector.shape_cast %57 : vector<128xf32> to vector<1x128xf32>
    %c0_35 = arith.constant 0 : index
    %c0_36 = arith.constant 0 : index
    %59 = vector.load %arg11[%c0_35, %c0_36] : memref<1x1xf32, #tpu.memory_space<vmem>>, vector<1x1xf32>
    %60 = vector.broadcast %59 : vector<1x1xf32> to vector<1x128xf32>
    %61 = arith.addf %58, %60 : vector<1x128xf32>
    %cst_37 = arith.constant 5.000000e-01 : f32
    %62 = vector.broadcast %cst_37 : f32 to vector<1x128xf32>
    %63 = arith.mulf %62, %61 : vector<1x128xf32>
    %64 = math.tanh %63 : vector<1x128xf32>
    %cst_38 = arith.constant 5.000000e-01 : f32
    %65 = vector.broadcast %cst_38 : f32 to vector<1x128xf32>
    %66 = arith.mulf %65, %64 : vector<1x128xf32>
    %cst_39 = arith.constant 5.000000e-01 : f32
    %67 = vector.broadcast %cst_39 : f32 to vector<1x128xf32>
    %68 = arith.addf %66, %67 : vector<1x128xf32>
    %c0_40 = arith.constant 0 : index
    %c0_41 = arith.constant 0 : index
    %69 = vector.load %arg12[%c0_40, %c0_41] : memref<1x128xf32, #tpu.memory_space<vmem>>, vector<1x128xf32>
    tpu.vector_store %arg12[%c0_40, %c0_41], %68 {strides = array<i32>} : memref<1x128xf32, #tpu.memory_space<vmem>>, vector<1x128xf32>,
    return
  }
  func.func @transform_0(%arg0: i32) -> (i32, i32) {
    %c0_i32 = arith.constant 0 : i32
    %c0_i32_0 = arith.constant 0 : i32
    return %c0_i32, %arg0 : i32, i32
  }
  func.func @transform_1(%arg0: i32) -> (i32, i32) {
    %c0_i32 = arith.constant 0 : i32
    %c0_i32_0 = arith.constant 0 : i32
    %c0_i32_1 = arith.constant 0 : i32
    return %c0_i32, %c0_i32_0 : i32, i32
  }
  func.func @transform_2(%arg0: i32) -> (i32, i32) {
    %c0_i32 = arith.constant 0 : i32
    %c0_i32_0 = arith.constant 0 : i32
    %c0_i32_1 = arith.constant 0 : i32
    return %c0_i32, %c0_i32_0 : i32, i32
  }
  func.func @transform_3(%arg0: i32) -> (i32, i32) {
    %c0_i32 = arith.constant 0 : i32
    %c0_i32_0 = arith.constant 0 : i32
    %c0_i32_1 = arith.constant 0 : i32
    return %c0_i32, %c0_i32_0 : i32, i32
  }
  func.func @transform_4(%arg0: i32) -> (i32, i32) {
    %c0_i32 = arith.constant 0 : i32
    %c0_i32_0 = arith.constant 0 : i32
    %c0_i32_1 = arith.constant 0 : i32
    return %c0_i32, %c0_i32_0 : i32, i32
  }
  func.func @transform_5(%arg0: i32) -> (i32, i32) {
    %c0_i32 = arith.constant 0 : i32
    %c0_i32_0 = arith.constant 0 : i32
    %c0_i32_1 = arith.constant 0 : i32
    return %c0_i32, %c0_i32_0 : i32, i32
  }
  func.func @transform_6(%arg0: i32) -> (i32, i32) {
    %c0_i32 = arith.constant 0 : i32
    %c0_i32_0 = arith.constant 0 : i32
    %c0_i32_1 = arith.constant 0 : i32
    return %c0_i32, %c0_i32_0 : i32, i32
  }
  func.func @transform_7(%arg0: i32) -> (i32, i32) {
    %c0_i32 = arith.constant 0 : i32
    %c0_i32_0 = arith.constant 0 : i32
    %c0_i32_1 = arith.constant 0 : i32
    return %c0_i32, %c0_i32_0 : i32, i32
  }
  func.func @transform_8(%arg0: i32) -> (i32, i32) {
    %c0_i32 = arith.constant 0 : i32
    %c0_i32_0 = arith.constant 0 : i32
    %c0_i32_1 = arith.constant 0 : i32
    return %c0_i32, %c0_i32_0 : i32, i32
  }
  func.func @transform_9(%arg0: i32) -> (i32, i32) {
    %c0_i32 = arith.constant 0 : i32
    %c0_i32_0 = arith.constant 0 : i32
    %c0_i32_1 = arith.constant 0 : i32
    return %c0_i32, %c0_i32_0 : i32, i32
  }
  func.func @transform_10(%arg0: i32) -> (i32, i32) {
    %c0_i32 = arith.constant 0 : i32
    %c0_i32_0 = arith.constant 0 : i32
    %c0_i32_1 = arith.constant 0 : i32
    return %c0_i32, %c0_i32_0 : i32, i32
  }
  func.func @transform_11(%arg0: i32) -> (i32, i32) {
    %c0_i32 = arith.constant 0 : i32
    %c0_i32_0 = arith.constant 0 : i32
    return %c0_i32, %arg0 : i32, i32
  }
}

</mosaic_0001>

<llo_original>
// kernel: neural_network_forward.1
$region0: #{neural_network_forward.1}
  #allocation0 [shape = 'u32[]', space=smem, size = 0x4, offset = 0x4, fixed_abs, tag = 'smem constant byte address 0x4 - core index']
  #allocation1 [shape = 'u32[144,128]{1,0:T(1,128)}', space=vmem, size = 0x12000, scoped, tag = 'internal scratch']
  #allocation2 [shape = 'f32[1,1]{1,0:T(1,128)S(1)}', space=vmem, size = 0x200, scoped, tag = 'scoped memory for neural_network_forward.1']
  %s0 = inlined_call_operand.vmem [shape: bf16[8,128], index: 0, kind: input, shape index: {}]
  %s1 = inlined_call_operand.vmem [shape: bf16[16,8], index: 1, kind: input, shape index: {}]
  %s2 = inlined_call_operand.vmem [shape: f32[16,1], index: 2, kind: input, shape index: {}]
  %s3 = inlined_call_operand.vmem [shape: bf16[32,16], index: 3, kind: input, shape index: {}]
  %s4 = inlined_call_operand.vmem [shape: f32[32,1], index: 4, kind: input, shape index: {}]
  %s5 = inlined_call_operand.vmem [shape: bf16[64,32], index: 5, kind: input, shape index: {}]
  %s6 = inlined_call_operand.vmem [shape: f32[64,1], index: 6, kind: input, shape index: {}]
  %s7 = inlined_call_operand.vmem [shape: bf16[32,64], index: 7, kind: input, shape index: {}]
  %s8 = inlined_call_operand.vmem [shape: f32[32,1], index: 8, kind: input, shape index: {}]
  %s9 = inlined_call_operand.vmem [shape: f32[32,1], index: 9, kind: input, shape index: {}]
  %s10 = inlined_call_operand.<no memory space> [shape: f32[1,1], index: 10, kind: input, shape index: {}]
  %s11 = inlined_call_operand.vmem [shape: f32[1,128], index: 11, kind: output, shape index: {}]
  %s12 = sld [smem:[#allocation0]]
  $region54: #{neural_network_forward.1} parent=0
    _
  %s14 = ssub.s32 1, %s12
  %s15 = scalar_select 0, %s14, %s12
  %v16 = vstv %s10
  %17 = vst [vmem:[#allocation2] sm:$0x1] %v16
  // Predicated region
  $region2: #{neural_network_forward.1} parent=0 // pred_check
    _
  $region3: #{neural_network_forward.1} parent=0 // pred_check_branch
    %19 = sbr.rel (0) target = $region5
  $region4: #{neural_network_forward.1} parent=0 // pred_region
    _
  $region5: #{neural_network_forward.1} parent=0 // pred_fallthru
    _
  // Predicated region
  $region6: #{neural_network_forward.1} parent=0 // pred_check
    _
  $region7: #{neural_network_forward.1} parent=0 // pred_check_branch
    %21 = sbr.rel (0) target = $region9
  $region8: #{neural_network_forward.1} parent=0 // pred_region
    _
  $region9: #{neural_network_forward.1} parent=0 // pred_fallthru
    _
  // Predicated region
  $region10: #{neural_network_forward.1} parent=0 // pred_check
    _
  $region11: #{neural_network_forward.1} parent=0 // pred_check_branch
    %23 = sbr.rel (0) target = $region13
  $region12: #{neural_network_forward.1} parent=0 // pred_region
    _
  $region13: #{neural_network_forward.1} parent=0 // pred_fallthru
    _
  // Predicated region
  $region14: #{neural_network_forward.1} parent=0 // pred_check
    _
  $region15: #{neural_network_forward.1} parent=0 // pred_check_branch
    %25 = sbr.rel (0) target = $region17
  $region16: #{neural_network_forward.1} parent=0 // pred_region
    _
  $region17: #{neural_network_forward.1} parent=0 // pred_fallthru
    _
  // Predicated region
  $region18: #{neural_network_forward.1} parent=0 // pred_check
    _
  $region19: #{neural_network_forward.1} parent=0 // pred_check_branch
    %27 = sbr.rel (0) target = $region21
  $region20: #{neural_network_forward.1} parent=0 // pred_region
    _
  $region21: #{neural_network_forward.1} parent=0 // pred_fallthru
    _
  // Predicated region
  $region22: #{neural_network_forward.1} parent=0 // pred_check
    _
  $region23: #{neural_network_forward.1} parent=0 // pred_check_branch
    %29 = sbr.rel (0) target = $region25
  $region24: #{neural_network_forward.1} parent=0 // pred_region
    _
  $region25: #{neural_network_forward.1} parent=0 // pred_fallthru
    _
  // Predicated region
  $region26: #{neural_network_forward.1} parent=0 // pred_check
    _
  $region27: #{neural_network_forward.1} parent=0 // pred_check_branch
    %31 = sbr.rel (0) target = $region29
  $region28: #{neural_network_forward.1} parent=0 // pred_region
    _
  $region29: #{neural_network_forward.1} parent=0 // pred_fallthru
    _
  // Predicated region
  $region30: #{neural_network_forward.1} parent=0 // pred_check
    _
  $region31: #{neural_network_forward.1} parent=0 // pred_check_branch
    %33 = sbr.rel (0) target = $region33
  $region32: #{neural_network_forward.1} parent=0 // pred_region
    _
  $region33: #{neural_network_forward.1} parent=0 // pred_fallthru
    _
  // Predicated region
  $region34: #{neural_network_forward.1} parent=0 // pred_check
    _
  $region35: #{neural_network_forward.1} parent=0 // pred_check_branch
    %35 = sbr.rel (0) target = $region37
  $region36: #{neural_network_forward.1} parent=0 // pred_region
    _
  $region37: #{neural_network_forward.1} parent=0 // pred_fallthru
    _
  // Predicated region
  $region38: #{neural_network_forward.1} parent=0 // pred_check
    _
  $region39: #{neural_network_forward.1} parent=0 // pred_check_branch
    %37 = sbr.rel (0) target = $region41
  $region40: #{neural_network_forward.1} parent=0 // pred_region
    _
  $region41: #{neural_network_forward.1} parent=0 // pred_fallthru
    _
  // Predicated region
  $region42: #{neural_network_forward.1} parent=0 // pred_check
    _
  $region43: #{neural_network_forward.1} parent=0 // pred_check_branch
    %39 = sbr.rel (0) target = $region45
  $region44: #{neural_network_forward.1} parent=0 // pred_region
    _
  $region45: #{neural_network_forward.1} parent=0 // pred_fallthru
    _
  %v41 = vld [vmem:[%s0] sm:$0xf]
  %v42 = vld [vmem:[%s1] sm:$0xf]
  %v43 = vld [vmem:[%s1 + $0x4] sm:$0xf]
  %v44 = vld [vmem:[%s2] sm:$0xff]
  %v45 = vld [vmem:[%s2 + $0x8] sm:$0xff]
  %47 = vset.pattern.permute.xlu0 0
  %48 = vperm.xlu0 %47, %v44
  %v49 = vpop.permute.xlu0 %48
  %52 = vset.pattern.permute.xlu0 0
  %53 = vperm.xlu0 %52, %v45
  %v54 = vpop.permute.xlu0 %53
  %v58 = vunpack.c.l.b16 %v42
  %v59 = vunpack.c.l.b16 %v43
  %v60 = vpack.c.b16 %v59, %v58
  %vm61 = vcmask 64512
  %v63 = vsel %vm61, %v60, 0
  %vm65 = vcmask 1043456
  %v67 = vsel %vm65, %v41, 0
  %69 = vmatprep.subr.bf16.mxu0 0
  %70 = vmatpush1.bf16.msra.mxu0 %v67
  %71 = vmatprep.subr.bf16.mxu0 0
  %72 = vmatpush1.bf16.msra.mxu0 0
  %73 = vmatprep.subr.bf16.mxu0 0
  %74 = vmatpush1.bf16.msra.mxu0 0
  %75 = vmatprep.subr.bf16.mxu0 0
  %76 = vmatpush1.bf16.msra.mxu0 0
  %77 = vmatprep.subr.bf16.mxu0 0
  %78 = vmatpush1.bf16.msra.mxu0 0
  %79 = vmatprep.subr.bf16.mxu0 0
  %80 = vmatpush1.bf16.msra.mxu0 0
  %81 = vmatprep.subr.bf16.mxu0 0
  %82 = vmatpush1.bf16.msra.mxu0 0
  %83 = vmatprep.subr.bf16.mxu0 0
  %84 = vmatpush1.bf16.msra.mxu0 0
  %85 = vmatprep.subr.bf16.mxu0 0
  %86 = vmatpush1.bf16.msra.mxu0 0
  %87 = vmatprep.subr.bf16.mxu0 0
  %88 = vmatpush1.bf16.msra.mxu0 0
  %89 = vmatprep.subr.bf16.mxu0 0
  %90 = vmatpush1.bf16.msra.mxu0 0
  %91 = vmatprep.subr.bf16.mxu0 0
  %92 = vmatpush1.bf16.msra.mxu0 0
  %93 = vmatprep.subr.bf16.mxu0 0
  %94 = vmatpush1.bf16.msra.mxu0 0
  %95 = vmatprep.subr.bf16.mxu0 0
  %96 = vmatpush1.bf16.msra.mxu0 0
  %97 = vmatprep.subr.bf16.mxu0 0
  %98 = vmatpush1.bf16.msra.mxu0 0
  %99 = vmatprep.subr.bf16.mxu0 0
  %100 = vmatpush1.bf16.msra.mxu0 0
  %101 = vmatprep.mubr.bf16.mxu0 0
  %102 = vmatmul.mubr.bf16.gmra.mrb[0].mxu0 %v63
  %v103 = vpop.f32.mrb[0].mxu0
  %v104 = vadd.f32 %v49, %v103
  %v105 = vpop.f32.mrb[0].mxu0
  %v106 = vpop.f32.mrb[0].mxu0
  %v107 = vadd.f32 %v54, %v106
  %v108 = vpop.f32.mrb[0].mxu0
  %109 = vdwg.mxu0
  %v110 = vmul.f32 %v104, 0.5
  %v111 = vmul.f32 %v107, 0.5
  %v112 = vtanh.pop %v110
  %v113 = vtanh.pop %v111
  %v114 = vmul.f32 %v112, 0.5
  %v115 = vmul.f32 %v113, 0.5
  %v116 = vadd.f32 %v114, 0.5
  %v117 = vadd.f32 %v115, 0.5
  %v118 = vpack.c.bf16 %v117, %v116
  %v119 = vld [vmem:[%s3] sm:$0xf]
  %v120 = vld [vmem:[%s3 + $0x4] sm:$0xf]
  %v121 = vld [vmem:[%s3 + $0x8] sm:$0xf]
  %v122 = vld [vmem:[%s3 + $0xc] sm:$0xf]
  %v123 = vld [vmem:[%s4] sm:$0xff]
  %v124 = vld [vmem:[%s4 + $0x8] sm:$0xff]
  %v125 = vld [vmem:[%s4 + $0x10] sm:$0xff]
  %v126 = vld [vmem:[%s4 + $0x18] sm:$0xff]
  %128 = vset.pattern.permute.xlu0 0
  %129 = vperm.xlu0 %128, %v123
  %v130 = vpop.permute.xlu0 %129
  %133 = vset.pattern.permute.xlu0 0
  %134 = vperm.xlu0 %133, %v124
  %v135 = vpop.permute.xlu0 %134
  %138 = vset.pattern.permute.xlu0 0
  %139 = vperm.xlu0 %138, %v125
  %v140 = vpop.permute.xlu0 %139
  %143 = vset.pattern.permute.xlu0 0
  %144 = vperm.xlu0 %143, %v126
  %v145 = vpop.permute.xlu0 %144
  %v151 = vunpack.c.l.b16 %v119
  %v152 = vunpack.c.l.b16 %v120
  %v153 = vunpack.c.l.b16 %v121
  %v154 = vunpack.c.l.b16 %v122
  %v155 = vpack.c.b16 %v152, %v151
  %v156 = vpack.c.b16 %v154, %v153
  %vm157 = vcmask 130048
  %v159 = vsel %vm157, %v155, 0
  %v162 = vsel %vm157, %v156, 0
  %164 = vmatprep.subr.bf16.mxu0 0
  %165 = vmatpush1.bf16.msra.mxu0 %v118
  %166 = vmatprep.subr.bf16.mxu0 0
  %167 = vmatpush1.bf16.msra.mxu0 0
  %168 = vmatprep.subr.bf16.mxu0 0
  %169 = vmatpush1.bf16.msra.mxu0 0
  %170 = vmatprep.subr.bf16.mxu0 0
  %171 = vmatpush1.bf16.msra.mxu0 0
  %172 = vmatprep.subr.bf16.mxu0 0
  %173 = vmatpush1.bf16.msra.mxu0 0
  %174 = vmatprep.subr.bf16.mxu0 0
  %175 = vmatpush1.bf16.msra.mxu0 0
  %176 = vmatprep.subr.bf16.mxu0 0
  %177 = vmatpush1.bf16.msra.mxu0 0
  %178 = vmatprep.subr.bf16.mxu0 0
  %179 = vmatpush1.bf16.msra.mxu0 0
  %180 = vmatprep.subr.bf16.mxu0 0
  %181 = vmatpush1.bf16.msra.mxu0 0
  %182 = vmatprep.subr.bf16.mxu0 0
  %183 = vmatpush1.bf16.msra.mxu0 0
  %184 = vmatprep.subr.bf16.mxu0 0
  %185 = vmatpush1.bf16.msra.mxu0 0
  %186 = vmatprep.subr.bf16.mxu0 0
  %187 = vmatpush1.bf16.msra.mxu0 0
  %188 = vmatprep.subr.bf16.mxu0 0
  %189 = vmatpush1.bf16.msra.mxu0 0
  %190 = vmatprep.subr.bf16.mxu0 0
  %191 = vmatpush1.bf16.msra.mxu0 0
  %192 = vmatprep.subr.bf16.mxu0 0
  %193 = vmatpush1.bf16.msra.mxu0 0
  %194 = vmatprep.subr.bf16.mxu0 0
  %195 = vmatpush1.bf16.msra.mxu0 0
  %196 = vmatprep.mubr.bf16.mxu0 0
  %197 = vmatmul.mubr.bf16.gmra.mrb[0].mxu0 %v159
  %v198 = vpop.f32.mrb[0].mxu0
  %v199 = vadd.f32 %v130, %v198
  %v200 = vpop.f32.mrb[0].mxu0
  %v201 = vpop.f32.mrb[0].mxu0
  %v202 = vadd.f32 %v135, %v201
  %v203 = vpop.f32.mrb[0].mxu0
  %204 = vmatprep.mubr.bf16.mxu0 0
  %205 = vmatmul.mubr.bf16.gmra.mrb[0].mxu0 %v162
  %v206 = vpop.f32.mrb[0].mxu0
  %v207 = vadd.f32 %v140, %v206
  %v208 = vpop.f32.mrb[0].mxu0
  %v209 = vpop.f32.mrb[0].mxu0
  %v210 = vadd.f32 %v145, %v209
  %v211 = vpop.f32.mrb[0].mxu0
  %212 = vdwg.mxu0
  %v213 = vmul.f32 %v199, 0.5
  %v214 = vmul.f32 %v202, 0.5
  %v215 = vmul.f32 %v207, 0.5
  %v216 = vmul.f32 %v210, 0.5
  %v217 = vtanh.pop %v213
  %v218 = vtanh.pop %v214
  %v219 = vtanh.pop %v215
  %v220 = vtanh.pop %v216
  %v221 = vmul.f32 %v217, 0.5
  %v222 = vmul.f32 %v218, 0.5
  %v223 = vmul.f32 %v219, 0.5
  %v224 = vmul.f32 %v220, 0.5
  %v225 = vadd.f32 %v221, 0.5
  %v226 = vadd.f32 %v222, 0.5
  %v227 = vadd.f32 %v223, 0.5
  %v228 = vadd.f32 %v224, 0.5
  %v229 = vpack.c.bf16 %v226, %v225
  %v230 = vpack.c.bf16 %v228, %v227
  %v231 = vld [vmem:[%s5] sm:$0xf]
  %v232 = vld [vmem:[%s5 + $0x4] sm:$0xf]
  %v233 = vld [vmem:[%s5 + $0x8] sm:$0xf]
  %v234 = vld [vmem:[%s5 + $0xc] sm:$0xf]
  %v235 = vld [vmem:[%s5 + $0x10] sm:$0xf]
  %v236 = vld [vmem:[%s5 + $0x14] sm:$0xf]
  %v237 = vld [vmem:[%s5 + $0x18] sm:$0xf]
  %v238 = vld [vmem:[%s5 + $0x1c] sm:$0xf]
  %v239 = vld [vmem:[%s6] sm:$0xff]
  %v240 = vld [vmem:[%s6 + $0x8] sm:$0xff]
  %v241 = vld [vmem:[%s6 + $0x10] sm:$0xff]
  %v242 = vld [vmem:[%s6 + $0x18] sm:$0xff]
  %v243 = vld [vmem:[%s6 + $0x20] sm:$0xff]
  %v244 = vld [vmem:[%s6 + $0x28] sm:$0xff]
  %v245 = vld [vmem:[%s6 + $0x30] sm:$0xff]
  %v246 = vld [vmem:[%s6 + $0x38] sm:$0xff]
  %248 = vset.pattern.permute.xlu0 0
  %249 = vperm.xlu0 %248, %v239
  %v250 = vpop.permute.xlu0 %249
  %253 = vset.pattern.permute.xlu0 0
  %254 = vperm.xlu0 %253, %v240
  %v255 = vpop.permute.xlu0 %254
  %258 = vset.pattern.permute.xlu0 0
  %259 = vperm.xlu0 %258, %v241
  %v260 = vpop.permute.xlu0 %259
  %263 = vset.pattern.permute.xlu0 0
  %264 = vperm.xlu0 %263, %v242
  %v265 = vpop.permute.xlu0 %264
  %268 = vset.pattern.permute.xlu0 0
  %269 = vperm.xlu0 %268, %v243
  %v270 = vpop.permute.xlu0 %269
  %273 = vset.pattern.permute.xlu0 0
  %274 = vperm.xlu0 %273, %v244
  %v275 = vpop.permute.xlu0 %274
  %278 = vset.pattern.permute.xlu0 0
  %279 = vperm.xlu0 %278, %v245
  %v280 = vpop.permute.xlu0 %279
  %283 = vset.pattern.permute.xlu0 0
  %284 = vperm.xlu0 %283, %v246
  %v285 = vpop.permute.xlu0 %284
  %v295 = vunpack.c.l.b16 %v231
  %v296 = vunpack.c.l.b16 %v232
  %v297 = vunpack.c.l.b16 %v233
  %v298 = vunpack.c.l.b16 %v234
  %v299 = vunpack.c.l.b16 %v235
  %v300 = vunpack.c.l.b16 %v236
  %v301 = vunpack.c.l.b16 %v237
  %v302 = vunpack.c.l.b16 %v238
  %v303 = vpack.c.b16 %v296, %v295
  %v304 = vpack.c.b16 %v298, %v297
  %v305 = vpack.c.b16 %v300, %v299
  %v306 = vpack.c.b16 %v302, %v301
  %vm307 = vcmask 261120
  %v309 = vsel %vm307, %v303, 0
  %v312 = vsel %vm307, %v304, 0
  %v315 = vsel %vm307, %v305, 0
  %v318 = vsel %vm307, %v306, 0
  %320 = vmatprep.subr.bf16.mxu0 0
  %321 = vmatpush1.bf16.msra.mxu0 %v229
  %322 = vmatprep.subr.bf16.mxu0 0
  %323 = vmatpush1.bf16.msra.mxu0 %v230
  %324 = vmatprep.subr.bf16.mxu0 0
  %325 = vmatpush1.bf16.msra.mxu0 0
  %326 = vmatprep.subr.bf16.mxu0 0
  %327 = vmatpush1.bf16.msra.mxu0 0
  %328 = vmatprep.subr.bf16.mxu0 0
  %329 = vmatpush1.bf16.msra.mxu0 0
  %330 = vmatprep.subr.bf16.mxu0 0
  %331 = vmatpush1.bf16.msra.mxu0 0
  %332 = vmatprep.subr.bf16.mxu0 0
  %333 = vmatpush1.bf16.msra.mxu0 0
  %334 = vmatprep.subr.bf16.mxu0 0
  %335 = vmatpush1.bf16.msra.mxu0 0
  %336 = vmatprep.subr.bf16.mxu0 0
  %337 = vmatpush1.bf16.msra.mxu0 0
  %338 = vmatprep.subr.bf16.mxu0 0
  %339 = vmatpush1.bf16.msra.mxu0 0
  %340 = vmatprep.subr.bf16.mxu0 0
  %341 = vmatpush1.bf16.msra.mxu0 0
  %342 = vmatprep.subr.bf16.mxu0 0
  %343 = vmatpush1.bf16.msra.mxu0 0
  %344 = vmatprep.subr.bf16.mxu0 0
  %345 = vmatpush1.bf16.msra.mxu0 0
  %346 = vmatprep.subr.bf16.mxu0 0
  %347 = vmatpush1.bf16.msra.mxu0 0
  %348 = vmatprep.subr.bf16.mxu0 0
  %349 = vmatpush1.bf16.msra.mxu0 0
  %350 = vmatprep.subr.bf16.mxu0 0
  %351 = vmatpush1.bf16.msra.mxu0 0
  %352 = vmatprep.mubr.bf16.mxu0 0
  %353 = vmatmul.mubr.bf16.gmra.mrb[0].mxu0 %v309
  %v354 = vpop.f32.mrb[0].mxu0
  %v355 = vadd.f32 %v250, %v354
  %v356 = vpop.f32.mrb[0].mxu0
  %v357 = vpop.f32.mrb[0].mxu0
  %v358 = vadd.f32 %v255, %v357
  %v359 = vpop.f32.mrb[0].mxu0
  %360 = vmatprep.mubr.bf16.mxu0 0
  %361 = vmatmul.mubr.bf16.gmra.mrb[0].mxu0 %v312
  %v362 = vpop.f32.mrb[0].mxu0
  %v363 = vadd.f32 %v260, %v362
  %v364 = vpop.f32.mrb[0].mxu0
  %v365 = vpop.f32.mrb[0].mxu0
  %v366 = vadd.f32 %v265, %v365
  %v367 = vpop.f32.mrb[0].mxu0
  %368 = vmatprep.mubr.bf16.mxu0 0
  %369 = vmatmul.mubr.bf16.gmra.mrb[0].mxu0 %v315
  %v370 = vpop.f32.mrb[0].mxu0
  %v371 = vadd.f32 %v270, %v370
  %v372 = vpop.f32.mrb[0].mxu0
  %v373 = vpop.f32.mrb[0].mxu0
  %v374 = vadd.f32 %v275, %v373
  %v375 = vpop.f32.mrb[0].mxu0
  %376 = vmatprep.mubr.bf16.mxu0 0
  %377 = vmatmul.mubr.bf16.gmra.mrb[0].mxu0 %v318
  %v378 = vpop.f32.mrb[0].mxu0
  %v379 = vadd.f32 %v280, %v378
  %v380 = vpop.f32.mrb[0].mxu0
  %v381 = vpop.f32.mrb[0].mxu0
  %v382 = vadd.f32 %v285, %v381
  %v383 = vpop.f32.mrb[0].mxu0
  %384 = vdwg.mxu0
  %v385 = vmul.f32 %v355, 0.5
  %v386 = vmul.f32 %v358, 0.5
  %v387 = vmul.f32 %v363, 0.5
  %v388 = vmul.f32 %v366, 0.5
  %v389 = vmul.f32 %v371, 0.5
  %v390 = vmul.f32 %v374, 0.5
  %v391 = vmul.f32 %v379, 0.5
  %v392 = vmul.f32 %v382, 0.5
  %v393 = vtanh.pop %v385
  %v394 = vtanh.pop %v386
  %v395 = vtanh.pop %v387
  %v396 = vtanh.pop %v388
  %v397 = vtanh.pop %v389
  %v398 = vtanh.pop %v390
  %v399 = vtanh.pop %v391
  %v400 = vtanh.pop %v392
  %v401 = vmul.f32 %v393, 0.5
  %v402 = vmul.f32 %v394, 0.5
  %v403 = vmul.f32 %v395, 0.5
  %v404 = vmul.f32 %v396, 0.5
  %v405 = vmul.f32 %v397, 0.5
  %v406 = vmul.f32 %v398, 0.5
  %v407 = vmul.f32 %v399, 0.5
  %v408 = vmul.f32 %v400, 0.5
  %v409 = vadd.f32 %v401, 0.5
  %v410 = vadd.f32 %v402, 0.5
  %v411 = vadd.f32 %v403, 0.5
  %v412 = vadd.f32 %v404, 0.5
  %v413 = vadd.f32 %v405, 0.5
  %v414 = vadd.f32 %v406, 0.5
  %v415 = vadd.f32 %v407, 0.5
  %v416 = vadd.f32 %v408, 0.5
  %v417 = vpack.c.bf16 %v410, %v409
  %v418 = vpack.c.bf16 %v412, %v411
  %v419 = vpack.c.bf16 %v414, %v413
  %v420 = vpack.c.bf16 %v416, %v415
  %v421 = vld [vmem:[%s7] sm:$0xf]
  %v422 = vld [vmem:[%s7 + $0x4] sm:$0xf]
  %v423 = vld [vmem:[%s7 + $0x8] sm:$0xf]
  %v424 = vld [vmem:[%s7 + $0xc] sm:$0xf]
  %v425 = vld [vmem:[%s8] sm:$0xff]
  %v426 = vld [vmem:[%s8 + $0x8] sm:$0xff]
  %v427 = vld [vmem:[%s8 + $0x10] sm:$0xff]
  %v428 = vld [vmem:[%s8 + $0x18] sm:$0xff]
  %430 = vset.pattern.permute.xlu0 0
  %431 = vperm.xlu0 %430, %v425
  %v432 = vpop.permute.xlu0 %431
  %435 = vset.pattern.permute.xlu0 0
  %436 = vperm.xlu0 %435, %v426
  %v437 = vpop.permute.xlu0 %436
  %440 = vset.pattern.permute.xlu0 0
  %441 = vperm.xlu0 %440, %v427
  %v442 = vpop.permute.xlu0 %441
  %445 = vset.pattern.permute.xlu0 0
  %446 = vperm.xlu0 %445, %v428
  %v447 = vpop.permute.xlu0 %446
  %v453 = vunpack.c.l.b16 %v421
  %v454 = vunpack.c.l.b16 %v422
  %v455 = vunpack.c.l.b16 %v423
  %v456 = vunpack.c.l.b16 %v424
  %v457 = vpack.c.b16 %v454, %v453
  %v458 = vpack.c.b16 %v456, %v455
  %vm459 = vcmask 523264
  %v461 = vsel %vm459, %v457, 0
  %v464 = vsel %vm459, %v458, 0
  %466 = vmatprep.subr.bf16.mxu0 0
  %467 = vmatpush1.bf16.msra.mxu0 %v417
  %468 = vmatprep.subr.bf16.mxu0 0
  %469 = vmatpush1.bf16.msra.mxu0 %v418
  %470 = vmatprep.subr.bf16.mxu0 0
  %471 = vmatpush1.bf16.msra.mxu0 %v419
  %472 = vmatprep.subr.bf16.mxu0 0
  %473 = vmatpush1.bf16.msra.mxu0 %v420
  %474 = vmatprep.subr.bf16.mxu0 0
  %475 = vmatpush1.bf16.msra.mxu0 0
  %476 = vmatprep.subr.bf16.mxu0 0
  %477 = vmatpush1.bf16.msra.mxu0 0
  %478 = vmatprep.subr.bf16.mxu0 0
  %479 = vmatpush1.bf16.msra.mxu0 0
  %480 = vmatprep.subr.bf16.mxu0 0
  %481 = vmatpush1.bf16.msra.mxu0 0
  %482 = vmatprep.subr.bf16.mxu0 0
  %483 = vmatpush1.bf16.msra.mxu0 0
  %484 = vmatprep.subr.bf16.mxu0 0
  %485 = vmatpush1.bf16.msra.mxu0 0
  %486 = vmatprep.subr.bf16.mxu0 0
  %487 = vmatpush1.bf16.msra.mxu0 0
  %488 = vmatprep.subr.bf16.mxu0 0
  %489 = vmatpush1.bf16.msra.mxu0 0
  %490 = vmatprep.subr.bf16.mxu0 0
  %491 = vmatpush1.bf16.msra.mxu0 0
  %492 = vmatprep.subr.bf16.mxu0 0
  %493 = vmatpush1.bf16.msra.mxu0 0
  %494 = vmatprep.subr.bf16.mxu0 0
  %495 = vmatpush1.bf16.msra.mxu0 0
  %496 = vmatprep.subr.bf16.mxu0 0
  %497 = vmatpush1.bf16.msra.mxu0 0
  %498 = vmatprep.mubr.bf16.mxu0 0
  %499 = vmatmul.mubr.bf16.gmra.mrb[0].mxu0 %v461
  %v500 = vpop.f32.mrb[0].mxu0
  %v501 = vadd.f32 %v432, %v500
  %v502 = vpop.f32.mrb[0].mxu0
  %v503 = vpop.f32.mrb[0].mxu0
  %v504 = vadd.f32 %v437, %v503
  %v505 = vpop.f32.mrb[0].mxu0
  %506 = vmatprep.mubr.bf16.mxu0 0
  %507 = vmatmul.mubr.bf16.gmra.mrb[0].mxu0 %v464
  %v508 = vpop.f32.mrb[0].mxu0
  %v509 = vadd.f32 %v442, %v508
  %v510 = vpop.f32.mrb[0].mxu0
  %v511 = vpop.f32.mrb[0].mxu0
  %v512 = vadd.f32 %v447, %v511
  %v513 = vpop.f32.mrb[0].mxu0
  %514 = vdwg.mxu0
  %v515 = vmul.f32 %v501, 0.5
  %v516 = vmul.f32 %v504, 0.5
  %v517 = vmul.f32 %v509, 0.5
  %v518 = vmul.f32 %v512, 0.5
  %v519 = vtanh.pop %v515
  %v520 = vtanh.pop %v516
  %v521 = vtanh.pop %v517
  %v522 = vtanh.pop %v518
  %v523 = vmul.f32 %v519, 0.5
  %v524 = vmul.f32 %v520, 0.5
  %v525 = vmul.f32 %v521, 0.5
  %v526 = vmul.f32 %v522, 0.5
  %v527 = vadd.f32 %v523, 0.5
  %v528 = vadd.f32 %v524, 0.5
  %v529 = vadd.f32 %v525, 0.5
  %v530 = vadd.f32 %v526, 0.5
  %v531 = vpack.c.bf16 %v528, %v527
  %v532 = vpack.c.bf16 %v530, %v529
  %v533 = vld [vmem:[%s9] sm:$0xff]
  %v534 = vld [vmem:[%s9 + $0x8] sm:$0xff]
  %v535 = vld [vmem:[%s9 + $0x10] sm:$0xff]
  %v536 = vld [vmem:[%s9 + $0x18] sm:$0xff]
  %v537 = vunpack.c.l.bf16 %v531
  %v538 = vunpack.c.h.bf16 %v531
  %v539 = vunpack.c.l.bf16 %v532
  %v540 = vunpack.c.h.bf16 %v532
  %542 = vset.pattern.permute.xlu0 0
  %543 = vperm.xlu0 %542, %v533
  %v544 = vpop.permute.xlu0 %543
  %547 = vset.pattern.permute.xlu0 0
  %548 = vperm.xlu0 %547, %v534
  %v549 = vpop.permute.xlu0 %548
  %552 = vset.pattern.permute.xlu0 0
  %553 = vperm.xlu0 %552, %v535
  %v554 = vpop.permute.xlu0 %553
  %557 = vset.pattern.permute.xlu0 0
  %558 = vperm.xlu0 %557, %v536
  %v559 = vpop.permute.xlu0 %558
  %v561 = vmul.f32 %v544, %v537
  %v562 = vmul.f32 %v549, %v538
  %v563 = vmul.f32 %v554, %v539
  %v564 = vmul.f32 %v559, %v540
  %v565 = vadd.f32 %v561, %v562
  %v566 = vadd.f32 %v565, %v563
  %v567 = vadd.f32 %v566, %v564
  %v568 = vrot.slane %v567, 4
  %v569 = vadd.f32 %v567, %v568
  %v570 = vrot.slane %v569, 2
  %v571 = vadd.f32 %v569, %v570
  %v572 = vrot.slane %v571, 1
  %v573 = vadd.f32 %v571, %v572
  %v574 = vld [vmem:[#allocation2] sm:$0x1]
  %576 = vset.pattern.permute.xlu0 0
  %577 = vperm.xlu0 %576, %v574
  %v578 = vpop.permute.xlu0 %577
  %v580 = vlaneseq
  %v581 = vshrl.u32 %v580, 7
  %v582 = vsub.s32 0, %v581
  %v583 = vrot.slane %v578, %v582
  %v584 = vadd.f32 %v573, %v583
  %v585 = vmul.f32 %v584, 0.5
  %v586 = vtanh.pop %v585
  %v587 = vmul.f32 %v586, 0.5
  %v588 = vadd.f32 %v587, 0.5
  %589 = vst [vmem:[%s11] sm:$0x1] %v588
  // Predicated region
  $region46: #{neural_network_forward.1} parent=0 // pred_check
    _
  $region47: #{neural_network_forward.1} parent=0 // pred_check_branch
    %591 = sbr.rel (0) target = $region49
  $region48: #{neural_network_forward.1} parent=0 // pred_region
    _
  $region49: #{neural_network_forward.1} parent=0 // pred_fallthru
    _
  // Predicated region
  $region50: #{neural_network_forward.1} parent=0 // pred_check
    _
  $region51: #{neural_network_forward.1} parent=0 // pred_check_branch
    %593 = sbr.rel (0) target = $region53
  $region52: #{neural_network_forward.1} parent=0 // pred_region
    _
  $region53: #{neural_network_forward.1} parent=0 // pred_fallthru
    _

</llo_original>
